<compile_context>
chip_gen: v5e
topology: v5e:2x2
jax: 0.10.0
libtpu: 0.0.40
codegen_flags: <defaults>
</compile_context>

<pallas_src>
import jax
import jax.numpy as jnp
from jax.experimental import pallas as pl
from jax.experimental.pallas import tpu as pltpu


def _grouped_conv1d_kernel(x_ref, left_ref, right_ref, m_ref, w_ref, o_ref):
    """One grid step over a block of grouped rows.

    x_ref     : (R, G*C_in)          grouped input rows (G time steps / row)
    left_ref  : (Hl, G*C_in)         rows just before the block (last row used)
    right_ref : (Hr, G*C_in)         rows just after the block (first row used)
    m_ref     : (R, 2)               col0: prev-row mask, col1: next-row mask
    w_ref     : (3*G*C_in + 1, G*C_out)   [W_mid; W_prev; W_next; bias]
    o_ref     : (R, G*C_out)
    """
    rows, win = x_ref.shape

    xg = x_ref[...]                                     # (R, Win)
    left_row = left_ref[left_ref.shape[0] - 1:, :]      # (1, Win)
    right_row = right_ref[0:1, :]                       # (1, Win)

    # prev[r] = row r-1, nxt[r] = row r+1 (copies only the narrow 16-lane input).
    if rows > 1:
        prev = jnp.concatenate([left_row, xg[:rows - 1, :]], axis=0)
        nxt = jnp.concatenate([xg[1:, :], right_row], axis=0)
    else:
        prev = left_row
        nxt = right_row

    # Zero the neighbour rows that cross a sequence (= batch element) boundary
    # or fall outside the sequence (Conv1d zero padding).
    prev = prev * m_ref[:, 0:1]
    nxt = nxt * m_ref[:, 1:2]

    wm = w_ref[0:win, :]
    wp = w_ref[win:2 * win, :]
    wn = w_ref[2 * win:3 * win, :]
    bias = w_ref[3 * win:3 * win + 1, :]

    acc = jnp.dot(xg, wm, preferred_element_type=jnp.float32)
    acc = acc + jnp.dot(prev, wp, preferred_element_type=jnp.float32)
    acc = acc + jnp.dot(nxt, wn, preferred_element_type=jnp.float32)
    acc = acc + bias.astype(jnp.float32)

    o_ref[...] = acc.astype(o_ref.dtype)


def _pick_block_rows(total_rows, cap):
    """Largest multiple-of-8 divisor of total_rows that is <= cap (else total_rows)."""
    if total_rows <= cap:
        return total_rows
    best = None
    for cand in range(8, cap + 1, 8):
        if total_rows % cand == 0:
            best = cand
    # TODO(synk): if total_rows has no multiple-of-8 divisor <= cap, fall back to
    # one full-array block (correct, just a big step).
    return best if best is not None else total_rows


def cnn_encoder_base_forward(x, weight, bias, input_dim, kernel_size, *,
                             target_block_bytes=2 * 1024 * 1024,
                             block_rows=None):
    """Pallas implementation of CNNEncoderBase.forward.

    x      : (batch, total_features)  with total_features % input_dim == 0
    weight : (C_out, C_in, K)  -- PyTorch Conv1d weight layout
    bias   : (C_out,)
    returns: (batch, seq_len, C_out)
    """
    batch, total_features = x.shape
    if total_features % input_dim != 0:
        raise ValueError(
            f"Total features {total_features} not divisible by input_dim {input_dim}")
    seq_len = total_features // input_dim
    c_out, c_in, k = weight.shape
    assert c_in == input_dim and k == kernel_size
    if kernel_size % 2 != 1:
        # TODO(synk): even kernel_size gives l_out = seq_len - 1; this kernel assumes
        # l_out == seq_len (odd K) and does not wire that case up.
        raise NotImplementedError("cnn_encoder_base_forward requires odd kernel_size")
    pad = (kernel_size - 1) // 2

    # Time-step group size.  G=4 makes the output row G*C_out lanes (=128 for
    # C_out=32 -> unmasked stores).  Fall back to 2 / 1 for awkward seq_len.
    group = 4 if seq_len % 4 == 0 else (2 if seq_len % 2 == 0 else 1)
    if pad > group:
        # TODO(synk): pad > G would need more than one neighbour row per side.
        raise NotImplementedError(
            f"kernel_size {kernel_size} needs pad <= group size {group}")

    lr = seq_len // group            # grouped rows per batch element
    w_in = group * c_in              # lanes per grouped input row
    w_out = group * c_out            # lanes per grouped output row
    total_rows = batch * lr

    # ---- constant banded weights (built once in the wrapper) -----------------
    w_t = jnp.transpose(weight, (2, 1, 0))              # (K, C_in, C_out)
    zero_tap = jnp.zeros((c_in, c_out), weight.dtype)

    def tap(t):
        return w_t[t] if 0 <= t < kernel_size else zero_tap

    def banded(shift):
        # W[q*C_in + c, j*C_out + o] = w[o, c, q + shift - j + pad] (or 0).
        rows = []
        for q in range(group):
            rows.append(jnp.concatenate(
                [tap(q + shift - j + pad) for j in range(group)], axis=1))
        return jnp.concatenate(rows, axis=0)             # (G*C_in, G*C_out)

    bias_row = jnp.tile(bias.reshape(1, c_out), (1, group))      # (1, G*C_out)
    w_all = jnp.concatenate(
        [banded(0), banded(-group), banded(group), bias_row], axis=0
    ).astype(x.dtype)                                     # (3*G*C_in + 1, G*C_out)

    # ---- grouped / flattened views (pure row-major reshapes) -----------------
    xg = x.reshape(total_rows, w_in)

    # Per-row neighbour masks: row r's prev is invalid iff r starts a sequence,
    # its next is invalid iff r ends one.  Handles halo clamping and
    # batch-element boundaries anywhere inside a block, uniformly.
    mask_base = jnp.ones((lr, 2), x.dtype)
    mask_base = mask_base.at[0, 0].set(0).at[lr - 1, 1].set(0)
    masks = jnp.tile(mask_base, (batch, 1))              # (total_rows, 2)

    # ---- block / grid selection (~target_block_bytes HBM traffic per step) ---
    in_bytes = jnp.dtype(x.dtype).itemsize
    row_bytes = (w_in + w_out + 2) * in_bytes
    target_rows = max(8, target_block_bytes // row_bytes)

    if block_rows is not None:
        rows_per_step = block_rows
    else:
        rows_per_step = _pick_block_rows(total_rows, target_rows)
        # Keep >= 2 grid steps when cheap, so the v7x megacore has work to split.
        if rows_per_step == total_rows and total_rows % 16 == 0:
            rows_per_step = total_rows // 2
    if total_rows % rows_per_step != 0 or (
            rows_per_step % 8 != 0 and rows_per_step != total_rows):
        raise ValueError(
            f"block_rows={rows_per_step} must divide {total_rows} and be a "
            f"multiple of 8 (or equal to it)")
    n_steps = total_rows // rows_per_step

    x_spec = pl.BlockSpec((rows_per_step, w_in), lambda i: (i, 0))
    m_spec = pl.BlockSpec((rows_per_step, 2), lambda i: (i, 0))
    w_spec = pl.BlockSpec(w_all.shape, lambda i: (0, 0))
    o_spec = pl.BlockSpec((rows_per_step, w_out), lambda i: (i, 0))

    if n_steps > 1:
        # Halo rows come straight from the neighbouring blocks of xg itself
        # (8-row blocks, clamped at the array ends; invalid rows are zeroed by
        # the per-row masks in the kernel) -> x is read from HBM once.
        bpr = rows_per_step // 8
        n_hblk = total_rows // 8
        left_in = xg
        right_in = xg
        left_spec = pl.BlockSpec(
            (8, w_in), lambda i: (jnp.maximum(i * bpr - 1, 0), 0))
        right_spec = pl.BlockSpec(
            (8, w_in), lambda i: (jnp.minimum((i + 1) * bpr, n_hblk - 1), 0))
    else:
        # Single block: neighbours at the block edges are masked to zero anyway.
        zeros_halo = jnp.zeros((1, w_in), x.dtype)
        left_in = zeros_halo
        right_in = zeros_halo
        left_spec = pl.BlockSpec((1, w_in), lambda i: (0, 0))
        right_spec = pl.BlockSpec((1, w_in), lambda i: (0, 0))

    cost = pl.CostEstimate(
        flops=2 * total_rows * (3 * w_in) * w_out,
        transcendentals=0,
        bytes_accessed=(total_rows * (w_in + w_out + 2) * in_bytes
                        + 2 * n_steps * 8 * w_in * in_bytes
                        + w_all.size * w_all.dtype.itemsize),
    )

    out = pl.pallas_call(
        _grouped_conv1d_kernel,
        out_shape=jax.ShapeDtypeStruct((total_rows, w_out), x.dtype),
        grid_spec=pltpu.PrefetchScalarGridSpec(
            num_scalar_prefetch=0,
            grid=(n_steps,),
            in_specs=[x_spec, left_spec, right_spec, m_spec, w_spec],
            out_specs=o_spec,
        ),
        compiler_params=pltpu.CompilerParams(
            # Every output block is written exactly once -> parallel grid axis
            # (lets the v7x megacore split the steps).
            dimension_semantics=("parallel",),
            # ~2 MB blocks double-buffered + f32 accumulator stay well under
            # this even on v7x (64 MiB physical VMEM).
            vmem_limit_bytes=32 * 1024 * 1024,
        ),
        cost_estimate=cost,
    )(xg, left_in, right_in, masks, w_all)

    # Undo the time-step grouping: (B*L/G, G*C_out) -> (B, L, C_out), row-major.
    return out.reshape(batch, seq_len, c_out)


def _reference_forward(x, weight, bias, input_dim):
    """Pure-JAX reference mirroring the PyTorch module (for verification)."""
    batch, total_features = x.shape
    seq_len = total_features // input_dim
    k = weight.shape[2]
    pad = (k - 1) // 2
    x_bcl = jnp.transpose(x.reshape(batch, seq_len, input_dim), (0, 2, 1))  # NCW
    y = jax.lax.conv_general_dilated(
        x_bcl,
        weight,  # (C_out, C_in, K) == OIW
        window_strides=(1,),
        padding=[(pad, pad)],
        dimension_numbers=("NCW", "OIW", "NCW"),
    )
    y = y + bias[None, :, None]
    return jnp.transpose(y, (0, 2, 1))


if __name__ == "__main__":
    input_dim = 4
    output_dim = 32
    kernel_size = 3

    def make_case(key, batch, seq_len):
        kx, kw, kb = jax.random.split(key, 3)
        fan_in = input_dim * kernel_size
        bound = float(fan_in) ** -0.5
        weight = jax.random.uniform(
            kw, (output_dim, input_dim, kernel_size), jnp.float32, -bound, bound)
        bias = jax.random.uniform(kb, (output_dim,), jnp.float32, -bound, bound)
        x = jax.random.normal(kx, (batch, seq_len * input_dim), jnp.float32)
        return x, weight, bias

    key = jax.random.PRNGKey(0)
    k1, k2, k3 = jax.random.split(key, 3)

    # Case 1: the module's nominal small config.  Single grid step; the batch
    # boundary inside the block is handled by the per-row masks.
    x, w, b = make_case(k1, batch=2, seq_len=16)
    y = jax.block_until_ready(
        cnn_encoder_base_forward(x, w, b, input_dim, kernel_size))
    y_ref = _reference_forward(x, w, b, input_dim)
    assert y.shape == (2, 16, output_dim), y.shape
    assert jnp.allclose(y, y_ref, atol=1e-5, rtol=1e-5)

    # Case 2: longer sequence with forced small blocks -> exercises the
    # multi-step halo path (block boundaries inside and between batch elements).
    x, w, b = make_case(k2, batch=2, seq_len=256)
    y = jax.block_until_ready(
        cnn_encoder_base_forward(x, w, b, input_dim, kernel_size, block_rows=16))
    y_ref = _reference_forward(x, w, b, input_dim)
    assert y.shape == (2, 256, output_dim), y.shape
    assert jnp.allclose(y, y_ref, atol=1e-5, rtol=1e-5)

    # Case 3: odd batch / short sequence -> full-array block fallback
    # (block rows not a multiple of 8, zero-halo path).
    x, w, b = make_case(k3, batch=3, seq_len=24)
    y = jax.block_until_ready(
        cnn_encoder_base_forward(x, w, b, input_dim, kernel_size))
    y_ref = _reference_forward(x, w, b, input_dim)
    assert y.shape == (3, 24, output_dim), y.shape
    assert jnp.allclose(y, y_ref, atol=1e-5, rtol=1e-5)

    print("KERNEL_OK")
</pallas_src>

<mosaic_0001>
module attributes {stable_mosaic.version = 11 : i64} {
  func.func @_grouped_conv1d_kernel(%arg0: i32, %arg1: memref<8x16xf32, #tpu.memory_space<vmem>>, %arg2: memref<1x16xf32, #tpu.memory_space<vmem>>, %arg3: memref<1x16xf32, #tpu.memory_space<vmem>>, %arg4: memref<8x2xf32, #tpu.memory_space<vmem>>, %arg5: memref<49x128xf32, #tpu.memory_space<vmem>>, %arg6: memref<8x128xf32, #tpu.memory_space<vmem>>) attributes {dimension_semantics = [#tpu.dimension_semantics<parallel>], iteration_bounds = array<i64: 1>, scalar_prefetch = 0 : i64, scratch_operands = 0 : i64, tpu.core_type = #tpu.core_type<tc>, window_params = [{transform_indices = @transform_0, window_bounds = array<i64: 8, 16>}, {pipeline_mode = #tpu.pipeline_mode<synchronous>, transform_indices = @transform_1, window_bounds = array<i64: 1, 16>}, {pipeline_mode = #tpu.pipeline_mode<synchronous>, transform_indices = @transform_2, window_bounds = array<i64: 1, 16>}, {transform_indices = @transform_3, window_bounds = array<i64: 8, 2>}, {pipeline_mode = #tpu.pipeline_mode<synchronous>, transform_indices = @transform_4, window_bounds = array<i64: 49, 128>}, {transform_indices = @transform_5, window_bounds = array<i64: 8, 128>}]} {
    %c0 = arith.constant 0 : index
    %c0_0 = arith.constant 0 : index
    %0 = vector.load %arg1[%c0, %c0_0] : memref<8x16xf32, #tpu.memory_space<vmem>>, vector<8x16xf32>
    %c0_1 = arith.constant 0 : index
    %c0_2 = arith.constant 0 : index
    %1 = vector.load %arg2[%c0_1, %c0_2] : memref<1x16xf32, #tpu.memory_space<vmem>>, vector<1x16xf32>
    %c0_3 = arith.constant 0 : index
    %c0_4 = arith.constant 0 : index
    %2 = vector.load %arg3[%c0_3, %c0_4] : memref<1x16xf32, #tpu.memory_space<vmem>>, vector<1x16xf32>
    %3 = vector.extract_strided_slice %0 {offsets = [0, 0], sizes = [7, 16], strides = [1, 1]} : vector<8x16xf32> to vector<7x16xf32>
    %4 = tpu.concatenate %1, %3 in 0 : vector<1x16xf32>, vector<7x16xf32> -> vector<8x16xf32>
    %5 = vector.extract_strided_slice %0 {offsets = [1, 0], sizes = [7, 16], strides = [1, 1]} : vector<8x16xf32> to vector<7x16xf32>
    %6 = tpu.concatenate %5, %2 in 0 : vector<7x16xf32>, vector<1x16xf32> -> vector<8x16xf32>
    %c0_5 = arith.constant 0 : index
    %c0_6 = arith.constant 0 : index
    %7 = vector.load %arg4[%c0_5, %c0_6] : memref<8x2xf32, #tpu.memory_space<vmem>>, vector<8x1xf32>
    %8 = vector.broadcast %7 : vector<8x1xf32> to vector<8x16xf32>
    %9 = arith.mulf %4, %8 : vector<8x16xf32>
    %c0_7 = arith.constant 0 : index
    %c1 = arith.constant 1 : index
    %10 = vector.load %arg4[%c0_7, %c1] : memref<8x2xf32, #tpu.memory_space<vmem>>, vector<8x1xf32>
    %11 = vector.broadcast %10 : vector<8x1xf32> to vector<8x16xf32>
    %12 = arith.mulf %6, %11 : vector<8x16xf32>
    %c0_8 = arith.constant 0 : index
    %c0_9 = arith.constant 0 : index
    %13 = vector.load %arg5[%c0_8, %c0_9] : memref<49x128xf32, #tpu.memory_space<vmem>>, vector<16x128xf32>
    %c16 = arith.constant 16 : index
    %c0_10 = arith.constant 0 : index
    %14 = vector.load %arg5[%c16, %c0_10] : memref<49x128xf32, #tpu.memory_space<vmem>>, vector<16x128xf32>
    %c32 = arith.constant 32 : index
    %c0_11 = arith.constant 0 : index
    %15 = vector.load %arg5[%c32, %c0_11] : memref<49x128xf32, #tpu.memory_space<vmem>>, vector<16x128xf32>
    %c48 = arith.constant 48 : index
    %c0_12 = arith.constant 0 : index
    %16 = vector.load %arg5[%c48, %c0_12] : memref<49x128xf32, #tpu.memory_space<vmem>>, vector<1x128xf32>
    %cst = arith.constant dense<0.000000e+00> : vector<8x128xf32>
    %17 = tpu.matmul %0, %13, %cst {dimension_numbers = #tpu.dot_dimension_numbers<[1], [0], [0], [1], [0, 0, 1, 1], [], []>} : vector<8x16xf32>, vector<16x128xf32>, vector<8x128xf32> -> vector<8x128xf32>
    %cst_13 = arith.constant dense<0.000000e+00> : vector<8x128xf32>
    %18 = tpu.matmul %9, %14, %cst_13 {dimension_numbers = #tpu.dot_dimension_numbers<[1], [0], [0], [1], [0, 0, 1, 1], [], []>} : vector<8x16xf32>, vector<16x128xf32>, vector<8x128xf32> -> vector<8x128xf32>
    %19 = arith.addf %17, %18 : vector<8x128xf32>
    %cst_14 = arith.constant dense<0.000000e+00> : vector<8x128xf32>
    %20 = tpu.matmul %12, %15, %cst_14 {dimension_numbers = #tpu.dot_dimension_numbers<[1], [0], [0], [1], [0, 0, 1, 1], [], []>} : vector<8x16xf32>, vector<16x128xf32>, vector<8x128xf32> -> vector<8x128xf32>
    %21 = arith.addf %19, %20 : vector<8x128xf32>
    %22 = vector.broadcast %16 : vector<1x128xf32> to vector<8x128xf32>
    %23 = arith.addf %21, %22 : vector<8x128xf32>
    %c0_15 = arith.constant 0 : index
    %c0_16 = arith.constant 0 : index
    %24 = vector.load %arg6[%c0_15, %c0_16] : memref<8x128xf32, #tpu.memory_space<vmem>>, vector<8x128xf32>
    tpu.vector_store %arg6[%c0_15, %c0_16], %23 {strides = array<i32>} : memref<8x128xf32, #tpu.memory_space<vmem>>, vector<8x128xf32>,
    return
  }
  func.func @transform_0(%arg0: i32) -> (i32, i32) {
    %c0_i32 = arith.constant 0 : i32
    %c0_i32_0 = arith.constant 0 : i32
    return %arg0, %c0_i32 : i32, i32
  }
  func.func @transform_1(%arg0: i32) -> (i32, i32) {
    %c0_i32 = arith.constant 0 : i32
    %c0_i32_0 = arith.constant 0 : i32
    %c0_i32_1 = arith.constant 0 : i32
    return %c0_i32, %c0_i32_0 : i32, i32
  }
  func.func @transform_2(%arg0: i32) -> (i32, i32) {
    %c0_i32 = arith.constant 0 : i32
    %c0_i32_0 = arith.constant 0 : i32
    %c0_i32_1 = arith.constant 0 : i32
    return %c0_i32, %c0_i32_0 : i32, i32
  }
  func.func @transform_3(%arg0: i32) -> (i32, i32) {
    %c0_i32 = arith.constant 0 : i32
    %c0_i32_0 = arith.constant 0 : i32
    return %arg0, %c0_i32 : i32, i32
  }
  func.func @transform_4(%arg0: i32) -> (i32, i32) {
    %c0_i32 = arith.constant 0 : i32
    %c0_i32_0 = arith.constant 0 : i32
    %c0_i32_1 = arith.constant 0 : i32
    return %c0_i32, %c0_i32_0 : i32, i32
  }
  func.func @transform_5(%arg0: i32) -> (i32, i32) {
    %c0_i32 = arith.constant 0 : i32
    %c0_i32_0 = arith.constant 0 : i32
    return %arg0, %c0_i32 : i32, i32
  }
}

</mosaic_0001>

<llo_original>
// kernel: tpu_custom_call.1
$region0: #{tpu_custom_call.1}
  #allocation0 [shape = 'u32[]', space=smem, size = 0x4, offset = 0x4, fixed_abs, tag = 'smem constant byte address 0x4 - core index']
  #allocation1 [shape = 'u32[72,128]{1,0:T(1,128)}', space=vmem, size = 0x9000, scoped, tag = 'internal scratch']
  %s0 = inlined_call_operand.vmem [shape: f32[8,16], index: 0, kind: input, shape index: {}]
  %s1 = inlined_call_operand.vmem [shape: f32[1,16], index: 1, kind: input, shape index: {}]
  %s2 = inlined_call_operand.vmem [shape: f32[1,16], index: 2, kind: input, shape index: {}]
  %s3 = inlined_call_operand.vmem [shape: f32[8,2], index: 3, kind: input, shape index: {}]
  %s4 = inlined_call_operand.hbm [shape: f32[49,128], index: 4, kind: input, shape index: {}]
  %s5 = inlined_call_operand.hbm [shape: f32[8,128], index: 5, kind: output, shape index: {}]
  %s6 = sld [smem:[#allocation0]]
  $region34: #{tpu_custom_call.1} parent=0
    _
  %s8 = ssub.s32 1, %s6
  %s9 = scalar_select 0, %s8, %s6
  $region1: #{tpu_custom_call.1} parent=0
    #allocation2 [shape = 'u8[28672]{0}', space=vmem, size = 0x7000, scoped, tag = 'input window, operand 4, single buffered']
    #allocation3 [shape = 's32[1]{0}', space=sflag, size = 0x4, scoped, tag = 'scoped memory for tpu_custom_call.1']
    #allocation4 [shape = 's32[1]{0}', space=sflag, size = 0x4, scoped, tag = 'scoped memory for tpu_custom_call.1']
    #allocation5 [shape = 'u8[4096]{0}', space=vmem, size = 0x1000, scoped, tag = 'output window, operand 0, single buffered']
    %10 = vsyncpa [#allocation3], 0
    %11 = vsyncpa [#allocation4], 0
    // Predicated region
    $region2: #{tpu_custom_call.1} parent=1 // pred_check
      _
    $region3: #{tpu_custom_call.1} parent=1 // pred_check_branch
      %13 = sbr.rel (0) target = $region5
    $region4: #{tpu_custom_call.1} parent=1 // pred_region
      _
    $region5: #{tpu_custom_call.1} parent=1 // pred_fallthru
      _
    // Predicated region
    $region6: #{tpu_custom_call.1} parent=1 // pred_check
      _
    $region7: #{tpu_custom_call.1} parent=1 // pred_check_branch
      %15 = sbr.rel (0) target = $region9
    $region8: #{tpu_custom_call.1} parent=1 // pred_region
      _
    $region9: #{tpu_custom_call.1} parent=1 // pred_fallthru
      _
    // Predicated region
    $region10: #{tpu_custom_call.1} parent=1 // pred_check
      _
    $region11: #{tpu_custom_call.1} parent=1 // pred_check_branch
      %17 = sbr.rel (0) target = $region13
    $region12: #{tpu_custom_call.1} parent=1 // pred_region
      _
    $region13: #{tpu_custom_call.1} parent=1 // pred_fallthru
      _
    // Predicated region
    $region14: #{tpu_custom_call.1} parent=1 // pred_check
      _
    $region15: #{tpu_custom_call.1} parent=1 // pred_check_branch
      %19 = sbr.rel (0) target = $region17
    $region16: #{tpu_custom_call.1} parent=1 // pred_region
      _
    $region17: #{tpu_custom_call.1} parent=1 // pred_fallthru
      _
    // Predicated region
    $region18: #{tpu_custom_call.1} parent=1 // pred_check
      _
    $region19: #{tpu_custom_call.1} parent=1 // pred_check_branch
      %21 = sbr.rel (0) target = $region21
    $region20: #{tpu_custom_call.1} parent=1 // pred_region
      %23 = vsyncadd [#allocation3], 0
      %s24 = sshll.u32 %s4, 4
      %s25 = int_to_ptr.hbm [resolvable:$true] %s24
      %s26 = sshll.u32 [#allocation2], 4
      %s27 = int_to_ptr.vmem [resolvable:$true] %s26
      %32 = dma.hbm_to_vmem [thread:$0]  %s25, 896, %s27, [#allocation3], 128, 128, 8
    $region21: #{tpu_custom_call.1} parent=1 // pred_fallthru
      _
    // Predicated region
    $region22: #{tpu_custom_call.1} parent=1 // pred_check
      _
    $region23: #{tpu_custom_call.1} parent=1 // pred_check_branch
      %34 = sbr.rel (0) target = $region25
    $region24: #{tpu_custom_call.1} parent=1 // pred_region
      %36 = dma.done [#allocation3], 896
    $region25: #{tpu_custom_call.1} parent=1 // pred_fallthru
      _
    %v37 = vld [vmem:[%s0] sm:$0xff]
    %v38 = vld [vmem:[%s1] sm:$0x1]
    %v39 = vld [vmem:[%s2] sm:$0x1]
    %v41 = vrot.slane %v37, 7
    %vm43 = vcmask 1040384
    %v44 = vsel %vm43, %v38, %v41
    %v45 = vrot.slane %v37, 1
    %v48 = vperm.slane %v39, 0
    %vm50 = vcmask 1046528
    %v51 = vsel %vm50, %v45, %v48
    %v52 = vld [vmem:[%s3] sm:$0xff]
    %54 = vset.pattern.permute.xlu0 0
    %55 = vperm.xlu0 %54, %v52
    %v56 = vpop.permute.xlu0 %55
    %v58 = vmul.f32 %v44, %v56
    %59 = vset.pattern.permute.xlu0 1
    %60 = vperm.xlu0 %59, %v52
    %v61 = vpop.permute.xlu0 %60
    %v63 = vmul.f32 %v51, %v61
    %v64 = vld [vmem:[#allocation2] sm:$0xff]
    %v65 = vld [vmem:[#allocation2 + $0x8] sm:$0xff]
    %v66 = vld [vmem:[#allocation2 + $0x10] sm:$0xff]
    %v67 = vld [vmem:[#allocation2 + $0x18] sm:$0xff]
    %v68 = vld [vmem:[#allocation2 + $0x20] sm:$0xff]
    %v69 = vld [vmem:[#allocation2 + $0x28] sm:$0xff]
    %v70 = vld [vmem:[#allocation2 + $0x30] sm:$0x1]
    %vm71 = vcmask 130048
    %v73 = vsel %vm71, %v58, 0
    %75 = vmatpush.msra.mxu0 0.0
    %76 = vmatpush.msra.mxu0 0.0
    %77 = vmatpush.msra.mxu0 0.0
    %78 = vmatpush.msra.mxu0 0.0
    %79 = vmatpush.msra.mxu0 0.0
    %80 = vmatpush.msra.mxu0 0.0
    %81 = vmatpush.msra.mxu0 0.0
    %82 = vmatpush.msra.mxu0 0.0
    %83 = vmatpush.msra.mxu0 0.0
    %84 = vmatpush.msra.mxu0 0.0
    %85 = vmatpush.msra.mxu0 0.0
    %86 = vmatpush.msra.mxu0 0.0
    %87 = vmatpush.msra.mxu0 0.0
    %88 = vmatpush.msra.mxu0 0.0
    %89 = vmatpush.msra.mxu0 %v67
    %90 = vmatpush.msra.mxu0 %v66
    %91 = vmatmul.f32.gmra.mxu0 %v73
    %v92 = vpop.f32.mrf.mxu0
    %v93 = vadd.f32 0.0, %v92
    %94 = vdwg.mxu0
    %v95 = vsel %vm71, %v37, 0
    %97 = vmatpush.msra.mxu0 0.0
    %98 = vmatpush.msra.mxu0 0.0
    %99 = vmatpush.msra.mxu0 0.0
    %100 = vmatpush.msra.mxu0 0.0
    %101 = vmatpush.msra.mxu0 0.0
    %102 = vmatpush.msra.mxu0 0.0
    %103 = vmatpush.msra.mxu0 0.0
    %104 = vmatpush.msra.mxu0 0.0
    %105 = vmatpush.msra.mxu0 0.0
    %106 = vmatpush.msra.mxu0 0.0
    %107 = vmatpush.msra.mxu0 0.0
    %108 = vmatpush.msra.mxu0 0.0
    %109 = vmatpush.msra.mxu0 0.0
    %110 = vmatpush.msra.mxu0 0.0
    %111 = vmatpush.msra.mxu0 %v65
    %112 = vmatpush.msra.mxu0 %v64
    %113 = vmatmul.f32.gmra.mxu0 %v95
    %v114 = vpop.f32.mrf.mxu0
    %v115 = vadd.f32 %v93, %v114
    %116 = vdwg.mxu0
    %v118 = vsel %vm71, %v63, 0
    %120 = vmatpush.msra.mxu0 0.0
    %121 = vmatpush.msra.mxu0 0.0
    %122 = vmatpush.msra.mxu0 0.0
    %123 = vmatpush.msra.mxu0 0.0
    %124 = vmatpush.msra.mxu0 0.0
    %125 = vmatpush.msra.mxu0 0.0
    %126 = vmatpush.msra.mxu0 0.0
    %127 = vmatpush.msra.mxu0 0.0
    %128 = vmatpush.msra.mxu0 0.0
    %129 = vmatpush.msra.mxu0 0.0
    %130 = vmatpush.msra.mxu0 0.0
    %131 = vmatpush.msra.mxu0 0.0
    %132 = vmatpush.msra.mxu0 0.0
    %133 = vmatpush.msra.mxu0 0.0
    %134 = vmatpush.msra.mxu0 %v69
    %135 = vmatpush.msra.mxu0 %v68
    %136 = vmatmul.f32.gmra.mxu0 %v118
    %v137 = vpop.f32.mrf.mxu0
    %v138 = vadd.f32 0.0, %v137
    %139 = vdwg.mxu0
    %v140 = vadd.f32 %v115, %v138
    %v141 = vperm.slane %v70, 0
    %v142 = vadd.f32 %v140, %v141
    %143 = vst [vmem:[#allocation5] sm:$0xff] %v142
    // Predicated region
    $region26: #{tpu_custom_call.1} parent=1 // pred_check
      _
    $region27: #{tpu_custom_call.1} parent=1 // pred_check_branch
      %145 = sbr.rel (0) target = $region29
    $region28: #{tpu_custom_call.1} parent=1 // pred_region
      %147 = vsyncadd [#allocation4], 0
      %s149 = sshll.u32 [#allocation5], 4
      %s150 = int_to_ptr.vmem [resolvable:$true] %s149
      %s151 = sshll.u32 %s5, 4
      %s152 = int_to_ptr.hbm [resolvable:$true] %s151
      %154 = dma.vmem_to_hbm [thread:$0]  %s150, 128, %s152, [#allocation4]
    $region29: #{tpu_custom_call.1} parent=1 // pred_fallthru
      _
    // Predicated region
    $region30: #{tpu_custom_call.1} parent=1 // pred_check
      _
    $region31: #{tpu_custom_call.1} parent=1 // pred_check_branch
      %156 = sbr.rel (0) target = $region33
    $region32: #{tpu_custom_call.1} parent=1 // pred_region
      %158 = dma.done [#allocation4], 128
    $region33: #{tpu_custom_call.1} parent=1 // pred_fallthru
      _
    %159 = vsyncpa [#allocation3], 1
    %160 = vsyncpa [#allocation4], 1

</llo_original>
